<compile_context>
chip_gen: v7x
topology: tpu7x:2x2x1
jax: 0.10.0
libtpu: 0.0.40
codegen_flags: <defaults>
</compile_context>

<pallas_src>
import functools

import numpy as np
import jax
import jax.numpy as jnp
from jax.experimental import pallas as pl
from jax.experimental.pallas import tpu as pltpu


def _round_up(x, m):
    return (x + m - 1) // m * m


def _convt_sigmoid_kernel(x_ref, w_ref, o_ref, *, Nb, L, K, Coutp, Q_pad,
                          stride, dilation):
    """x_ref: (Nb*L, Cin_p) bf16, w_ref: (Cin_p, K*Coutp) bf16,
    o_ref: (Nb, stride, Q_pad, Coutp) f32.

    One aligned MXU matmul over the block-diagonal (all-groups) weight, then a
    per-tap zero-padded slab accumulation into per-residue (deinterleaved)
    output planes.  Every store is a full (8,128)-aligned, lane-dense,
    unmasked tile write; interleave/crop live in the wrapper.
    """
    f32 = jnp.float32
    # (Nb*L, K*Coutp): rows are (n, l) n-major/l-minor, cols are (k, cout) k-major.
    y = jnp.dot(x_ref[...], w_ref[...], preferred_element_type=f32)

    # Transposed conv: uncropped output position m = l*stride + k*dilation.
    # Decompose m = q*stride + r; tap k contributes to residue r_k at q = l + a_k
    # where a_k, r_k = divmod(k*dilation, stride).  Build one zero-padded slab
    # per tap along the q axis and accumulate taps sharing a residue.
    phases = [None] * stride
    for k in range(K):
        a_k, r_k = divmod(k * dilation, stride)
        slab = y[:, k * Coutp:(k + 1) * Coutp].reshape(Nb, L, Coutp)  # lane-aligned
        parts = []
        if a_k > 0:
            parts.append(jnp.zeros((Nb, a_k, Coutp), f32))
        parts.append(slab)
        tail = Q_pad - a_k - L
        if tail > 0:
            parts.append(jnp.zeros((Nb, tail, Coutp), f32))
        slab_q = jnp.concatenate(parts, axis=1) if len(parts) > 1 else parts[0]
        phases[r_k] = slab_q if phases[r_k] is None else phases[r_k] + slab_q

    for r in range(stride):
        if phases[r] is None:
            # Residue never hit by any tap: conv output is 0 there -> sigmoid(0)=0.5.
            o_ref[:, r, :, :] = jnp.full((Nb, Q_pad, Coutp), 0.5, f32)
        else:
            o_ref[:, r, :, :] = jax.nn.sigmoid(phases[r])


def make_block_diagonal_weight(w, groups, *, compute_dtype=jnp.bfloat16):
    """Parameter-only preprocessing (run ONCE, not per forward call).

    w: (Cin, Cout//groups, K) in PyTorch ConvTranspose1d layout.
    Returns the zero-padded block-diagonal matrix (Cin_p, K*Coutp), columns
    ordered k-major / cout-minor, cast to the MXU compute dtype.
    """
    Cin, Cout_g, K = w.shape
    G = groups
    assert Cin % G == 0
    Cin_g = Cin // G
    Cout = Cout_g * G
    Cin_p = _round_up(Cin, 128)
    Coutp = _round_up(Cout, 128)

    wg = w.reshape(G, Cin_g, Cout_g, K)
    eye = jnp.eye(G, dtype=w.dtype)
    bd = jnp.einsum('gick,gh->gikhc', wg, eye)            # (G, Cin_g, K, G, Cout_g)
    bd = bd.reshape(Cin, K, Cout)
    bd = jnp.pad(bd, ((0, Cin_p - Cin), (0, 0), (0, Coutp - Cout)))
    return bd.reshape(Cin_p, K * Coutp).astype(compute_dtype)


def _default_batch_split():
    """2-way 'parallel' batch split only on 2-TensorCore chips (v7x).

    On single-TC v5e/v6e the extra grid step costs ~0.35us and halves the
    matmul M dim for zero benefit.
    """
    try:
        kind = (jax.devices()[0].device_kind or "").lower()
    except Exception:
        kind = ""
    return 2 if "v7" in kind else 1


@functools.partial(
    jax.jit,
    static_argnames=("stride", "padding", "dilation", "cout", "nb_split"))
def conv_transpose1d_sigmoid(x, wbdp, *, stride, padding, dilation, cout,
                             nb_split):
    """x: (N, Cin, L) f32; wbdp: precomputed (Cin_p, K*Coutp) block-diag weight.

    Returns (N, cout, L_out) f32 = sigmoid(conv_transpose1d(x)).
    """
    N, Cin, L = x.shape
    Cin_p = wbdp.shape[0]
    Coutp = _round_up(cout, 128)
    assert Cin_p >= Cin and wbdp.shape[1] % Coutp == 0
    K = wbdp.shape[1] // Coutp

    L_out = (L - 1) * stride - 2 * padding + dilation * (K - 1) + 1
    assert L_out > 0
    L_full = (L - 1) * stride + dilation * (K - 1) + 1
    Q = -(-L_full // stride)                 # ceil(L_full / stride)
    Q_pad = _round_up(Q, 8)

    # Layout plumbing: rows n-major / l-minor; contraction dim zero-padded;
    # cast to the MXU compute dtype (bf16, f32 accumulation in-kernel).
    # TODO(synk): keep activations in (N, L, C) upstream to drop this transpose.
    x2 = jnp.transpose(x, (0, 2, 1)).reshape(N * L, Cin)
    x2p = jnp.pad(x2, ((0, 0), (0, Cin_p - Cin))).astype(wbdp.dtype)

    NB = nb_split if (nb_split > 1 and N % nb_split == 0 and
                      ((N // nb_split) * L) % 8 == 0) else 1
    Nb = N // NB

    kernel = functools.partial(
        _convt_sigmoid_kernel, Nb=Nb, L=L, K=K, Coutp=Coutp, Q_pad=Q_pad,
        stride=stride, dilation=dilation)

    itemsize = 2 if wbdp.dtype == jnp.bfloat16 else 4
    cost = pl.CostEstimate(
        flops=2 * N * L * Cin_p * K * Coutp,
        transcendentals=N * stride * Q_pad * Coutp,
        bytes_accessed=(N * L * Cin_p * itemsize
                        + NB * Cin_p * K * Coutp * itemsize
                        + N * stride * Q_pad * Coutp * 4))

    out = pl.pallas_call(
        kernel,
        out_shape=jax.ShapeDtypeStruct((N, stride, Q_pad, Coutp), jnp.float32),
        grid=(NB,),
        in_specs=[
            pl.BlockSpec((Nb * L, Cin_p), lambda i: (i, 0)),
            pl.BlockSpec((Cin_p, K * Coutp), lambda i: (0, 0)),
        ],
        out_specs=pl.BlockSpec((Nb, stride, Q_pad, Coutp),
                               lambda i: (i, 0, 0, 0)),
        compiler_params=pltpu.CompilerParams(
            dimension_semantics=("parallel",)),
        cost_estimate=cost,
    )(x2p, wbdp)

    # Fold stride-interleave + [padding : padding+L_out] crop + NCL transpose
    # into one transpose/reshape/slice (fused by XLA under jit).
    full = jnp.transpose(out, (0, 3, 2, 1)).reshape(N, Coutp, Q_pad * stride)
    return full[:, :cout, padding:padding + L_out]


def _numpy_ref(x, w, stride, padding, dilation, groups):
    """Explicit ConvTranspose1d + sigmoid reference (PyTorch semantics)."""
    N, Cin, L = x.shape
    _, Cout_g, K = w.shape
    Cin_g = Cin // groups
    Cout = Cout_g * groups
    L_out = (L - 1) * stride - 2 * padding + dilation * (K - 1) + 1
    L_full = (L - 1) * stride + dilation * (K - 1) + 1
    y = np.zeros((N, Cout, L_full), np.float64)
    for g in range(groups):
        for n in range(N):
            for ic in range(Cin_g):
                for oc in range(Cout_g):
                    for k in range(K):
                        for l in range(L):
                            y[n, g * Cout_g + oc, l * stride + k * dilation] += (
                                float(x[n, g * Cin_g + ic, l])
                                * float(w[g * Cin_g + ic, oc, k]))
    y = y[:, :, padding:padding + L_out]
    return (1.0 / (1.0 + np.exp(-y))).astype(np.float32)


if __name__ == "__main__":
    # Small, valid shapes consistent with the module's structure.
    # (Original batch/in/out/groups = 22/424/254/22 with dilation=0 is invalid
    # for PyTorch itself; see TODO at top of file.)
    N, Cin, L = 2, 16, 8
    groups, K = 4, 2
    Cout = 8
    Cout_g = Cout // groups
    stride, padding, dilation = 3, 3, 1

    key = jax.random.PRNGKey(0)
    kx, kw = jax.random.split(key)
    x = jax.random.normal(kx, (N, Cin, L), dtype=jnp.float32)
    w = 0.1 * jax.random.normal(kw, (Cin, Cout_g, K), dtype=jnp.float32)

    # Parameter-only preprocessing, hoisted out of the per-call forward path.
    wbdp = make_block_diagonal_weight(w, groups)
    nb_split = _default_batch_split()

    out = conv_transpose1d_sigmoid(
        x, wbdp, stride=stride, padding=padding, dilation=dilation,
        cout=Cout, nb_split=nb_split)
    out = jax.block_until_ready(out)

    ref = _numpy_ref(np.asarray(x), np.asarray(w), stride, padding, dilation,
                     groups)
    assert out.shape == ref.shape, (out.shape, ref.shape)
    # bf16 matmul inputs (f32 accumulation) -> slightly relaxed tolerance.
    np.testing.assert_allclose(np.asarray(out), ref, rtol=3e-2, atol=2e-3)
    print("KERNEL_OK")
</pallas_src>

<mosaic_0001>
module attributes {stable_mosaic.version = 11 : i64} {
  func.func @_convt_sigmoid_kernel(%arg0: i32, %arg1: memref<16x128xbf16, #tpu.memory_space<vmem>>, %arg2: memref<128x256xbf16, #tpu.memory_space<vmem>>, %arg3: memref<2x3x8x128xf32, #tpu.memory_space<vmem>>) attributes {dimension_semantics = [#tpu.dimension_semantics<parallel>], iteration_bounds = array<i64: 1>, scalar_prefetch = 0 : i64, scratch_operands = 0 : i64, tpu.core_type = #tpu.core_type<tc>, window_params = [{transform_indices = @transform_0, window_bounds = array<i64: 16, 128>}, {pipeline_mode = #tpu.pipeline_mode<synchronous>, transform_indices = @transform_1, window_bounds = array<i64: 128, 256>}, {transform_indices = @transform_2, window_bounds = array<i64: 2, 3, 8, 128>}]} {
    %c0 = arith.constant 0 : index
    %c0_0 = arith.constant 0 : index
    %0 = vector.load %arg1[%c0, %c0_0] : memref<16x128xbf16, #tpu.memory_space<vmem>>, vector<16x128xbf16>
    %c0_1 = arith.constant 0 : index
    %c0_2 = arith.constant 0 : index
    %1 = vector.load %arg2[%c0_1, %c0_2] : memref<128x256xbf16, #tpu.memory_space<vmem>>, vector<128x256xbf16>
    %cst = arith.constant dense<0.000000e+00> : vector<16x256xf32>
    %2 = tpu.matmul %0, %1, %cst {dimension_numbers = #tpu.dot_dimension_numbers<[1], [0], [0], [1], [0, 0, 1, 1], [], []>} : vector<16x128xbf16>, vector<128x256xbf16>, vector<16x256xf32> -> vector<16x256xf32>
    %3 = vector.extract_strided_slice %2 {offsets = [0, 0], sizes = [16, 128], strides = [1, 1]} : vector<16x256xf32> to vector<16x128xf32>
    %4 = vector.shape_cast %3 : vector<16x128xf32> to vector<2x8x128xf32>
    %5 = vector.extract_strided_slice %2 {offsets = [0, 128], sizes = [16, 128], strides = [1, 1]} : vector<16x256xf32> to vector<16x128xf32>
    %6 = vector.shape_cast %5 : vector<16x128xf32> to vector<2x8x128xf32>
    %7 = arith.negf %4 : vector<2x8x128xf32>
    %8 = math.exp %7 : vector<2x8x128xf32>
    %cst_3 = arith.constant 1.000000e+00 : f32
    %9 = vector.broadcast %cst_3 : f32 to vector<2x8x128xf32>
    %10 = arith.addf %9, %8 : vector<2x8x128xf32>
    %11 = arith.divf %9, %10 : vector<2x8x128xf32>
    %c0_4 = arith.constant 0 : index
    %c0_5 = arith.constant 0 : index
    %c0_6 = arith.constant 0 : index
    %c0_7 = arith.constant 0 : index
    %12 = vector.load %arg3[%c0_4, %c0_5, %c0_6, %c0_7] : memref<2x3x8x128xf32, #tpu.memory_space<vmem>>, vector<2x1x8x128xf32>
    %13 = vector.shape_cast %12 : vector<2x1x8x128xf32> to vector<2x8x128xf32>
    %14 = vector.shape_cast %11 : vector<2x8x128xf32> to vector<2x1x8x128xf32>
    tpu.vector_store %arg3[%c0_4, %c0_5, %c0_6, %c0_7], %14 {strides = array<i32>} : memref<2x3x8x128xf32, #tpu.memory_space<vmem>>, vector<2x1x8x128xf32>,
    %15 = arith.negf %6 : vector<2x8x128xf32>
    %16 = math.exp %15 : vector<2x8x128xf32>
    %cst_8 = arith.constant 1.000000e+00 : f32
    %17 = vector.broadcast %cst_8 : f32 to vector<2x8x128xf32>
    %18 = arith.addf %17, %16 : vector<2x8x128xf32>
    %19 = arith.divf %17, %18 : vector<2x8x128xf32>
    %c0_9 = arith.constant 0 : index
    %c1 = arith.constant 1 : index
    %c0_10 = arith.constant 0 : index
    %c0_11 = arith.constant 0 : index
    %20 = vector.load %arg3[%c0_9, %c1, %c0_10, %c0_11] : memref<2x3x8x128xf32, #tpu.memory_space<vmem>>, vector<2x1x8x128xf32>
    %21 = vector.shape_cast %20 : vector<2x1x8x128xf32> to vector<2x8x128xf32>
    %22 = vector.shape_cast %19 : vector<2x8x128xf32> to vector<2x1x8x128xf32>
    tpu.vector_store %arg3[%c0_9, %c1, %c0_10, %c0_11], %22 {strides = array<i32>} : memref<2x3x8x128xf32, #tpu.memory_space<vmem>>, vector<2x1x8x128xf32>,
    %cst_12 = arith.constant 5.000000e-01 : f32
    %23 = vector.broadcast %cst_12 : f32 to vector<2x8x128xf32>
    %c0_13 = arith.constant 0 : index
    %c2 = arith.constant 2 : index
    %c0_14 = arith.constant 0 : index
    %c0_15 = arith.constant 0 : index
    %24 = vector.load %arg3[%c0_13, %c2, %c0_14, %c0_15] : memref<2x3x8x128xf32, #tpu.memory_space<vmem>>, vector<2x1x8x128xf32>
    %25 = vector.shape_cast %24 : vector<2x1x8x128xf32> to vector<2x8x128xf32>
    %26 = vector.shape_cast %23 : vector<2x8x128xf32> to vector<2x1x8x128xf32>
    tpu.vector_store %arg3[%c0_13, %c2, %c0_14, %c0_15], %26 {strides = array<i32>} : memref<2x3x8x128xf32, #tpu.memory_space<vmem>>, vector<2x1x8x128xf32>,
    return
  }
  func.func @transform_0(%arg0: i32) -> (i32, i32) {
    %c0_i32 = arith.constant 0 : i32
    %c0_i32_0 = arith.constant 0 : i32
    return %arg0, %c0_i32 : i32, i32
  }
  func.func @transform_1(%arg0: i32) -> (i32, i32) {
    %c0_i32 = arith.constant 0 : i32
    %c0_i32_0 = arith.constant 0 : i32
    %c0_i32_1 = arith.constant 0 : i32
    return %c0_i32, %c0_i32_0 : i32, i32
  }
  func.func @transform_2(%arg0: i32) -> (i32, i32, i32, i32) {
    %c0_i32 = arith.constant 0 : i32
    %c0_i32_0 = arith.constant 0 : i32
    %c0_i32_1 = arith.constant 0 : i32
    %c0_i32_2 = arith.constant 0 : i32
    return %arg0, %c0_i32, %c0_i32_0, %c0_i32_1 : i32, i32, i32, i32
  }
}

</mosaic_0001>

<llo_original>
// kernel: conv_transpose1d_sigmoid.1
$region0: #{conv_transpose1d_sigmoid.1}
  #allocation0 [shape = 'u32[]', space=smem, size = 0x4, offset = 0x4, fixed_abs, tag = 'smem constant byte address 0x4 - core index']
  #allocation1 [shape = 'u32[144,128]{1,0:T(1,128)}', space=vmem, size = 0x12000, scoped, tag = 'internal scratch']
  %s0 = inlined_call_operand.vmem [shape: bf16[16,128], index: 0, kind: input, shape index: {}]
  %s1 = inlined_call_operand.hbm [shape: bf16[128,256], index: 1, kind: input, shape index: {}]
  %s2 = inlined_call_operand.vmem [shape: f32[2,3,8,128], index: 2, kind: output, shape index: {}]
  %s3 = sld [smem:[#allocation0]]
  $region22: #{conv_transpose1d_sigmoid.1} parent=0
    _
  %s5 = ssub.s32 1, %s3
  %s6 = scalar_select 0, %s5, %s3
  $region1: #{conv_transpose1d_sigmoid.1} parent=0
    #allocation2 [shape = 'u8[65536]{0}', space=vmem, size = 0x10000, scoped, tag = 'input window, operand 1, single buffered']
    #allocation3 [shape = 's32[1]{0}', space=sflag, size = 0x4, scoped, tag = 'scoped memory for conv_transpose1d_sigmoid.1']
    %7 = vsyncpa [#allocation3], 0
    // Predicated region
    $region2: #{conv_transpose1d_sigmoid.1} parent=1 // pred_check
      _
    $region3: #{conv_transpose1d_sigmoid.1} parent=1 // pred_check_branch
      %9 = sbr.rel (0) target = $region5
    $region4: #{conv_transpose1d_sigmoid.1} parent=1 // pred_region
      _
    $region5: #{conv_transpose1d_sigmoid.1} parent=1 // pred_fallthru
      _
    // Predicated region
    $region6: #{conv_transpose1d_sigmoid.1} parent=1 // pred_check
      _
    $region7: #{conv_transpose1d_sigmoid.1} parent=1 // pred_check_branch
      %11 = sbr.rel (0) target = $region9
    $region8: #{conv_transpose1d_sigmoid.1} parent=1 // pred_region
      %s13 = ssub.s32 2048, 2048
      %14 = vsyncadd [#allocation3], %s13
      %s15 = sshll.u32 [#allocation2], 4
      %s16 = int_to_ptr.vmem [resolvable:$true] %s15
      %21 = dma.hbm_to_vmem [thread:$0]  %s1, 2048, %s16, [#allocation3], 128, 128, 8
    $region9: #{conv_transpose1d_sigmoid.1} parent=1 // pred_fallthru
      _
    // Predicated region
    $region10: #{conv_transpose1d_sigmoid.1} parent=1 // pred_check
      _
    $region11: #{conv_transpose1d_sigmoid.1} parent=1 // pred_check_branch
      %23 = sbr.rel (0) target = $region13
    $region12: #{conv_transpose1d_sigmoid.1} parent=1 // pred_region
      %24 = dma.done [#allocation3], 2048
    $region13: #{conv_transpose1d_sigmoid.1} parent=1 // pred_fallthru
      _
    %v26 = vld [vmem:[%s0] sm:$0xf]
    %v27 = vld [vmem:[%s0 + $0x4] sm:$0xf]
    %v28 = vld [vmem:[#allocation2] sm:$0xff]
    %v29 = vld [vmem:[#allocation2 + $0x8] sm:$0xff]
    %v30 = vld [vmem:[#allocation2 + $0x10] sm:$0xff]
    %v31 = vld [vmem:[#allocation2 + $0x18] sm:$0xff]
    %v32 = vld [vmem:[#allocation2 + $0x20] sm:$0xff]
    %v33 = vld [vmem:[#allocation2 + $0x28] sm:$0xff]
    %v34 = vld [vmem:[#allocation2 + $0x30] sm:$0xff]
    %v35 = vld [vmem:[#allocation2 + $0x38] sm:$0xff]
    %v36 = vld [vmem:[#allocation2 + $0x40] sm:$0xff]
    %v37 = vld [vmem:[#allocation2 + $0x48] sm:$0xff]
    %v38 = vld [vmem:[#allocation2 + $0x50] sm:$0xff]
    %v39 = vld [vmem:[#allocation2 + $0x58] sm:$0xff]
    %v40 = vld [vmem:[#allocation2 + $0x60] sm:$0xff]
    %v41 = vld [vmem:[#allocation2 + $0x68] sm:$0xff]
    %v42 = vld [vmem:[#allocation2 + $0x70] sm:$0xff]
    %v43 = vld [vmem:[#allocation2 + $0x78] sm:$0xff]
    %v46 = vunpack.c.l.b16 %v26
    %v47 = vunpack.c.l.b16 %v27
    %v48 = vpack.c.b16 %v47, %v46
    %v66 = vunpack.c.l.b16 %v28
    %v67 = vunpack.c.h.b16 %v28
    %v68 = vunpack.c.l.b16 %v29
    %v69 = vunpack.c.h.b16 %v29
    %v70 = vunpack.c.l.b16 %v30
    %v71 = vunpack.c.h.b16 %v30
    %v72 = vunpack.c.l.b16 %v31
    %v73 = vunpack.c.h.b16 %v31
    %v74 = vunpack.c.l.b16 %v32
    %v75 = vunpack.c.h.b16 %v32
    %v76 = vunpack.c.l.b16 %v33
    %v77 = vunpack.c.h.b16 %v33
    %v78 = vunpack.c.l.b16 %v34
    %v79 = vunpack.c.h.b16 %v34
    %v80 = vunpack.c.l.b16 %v35
    %v81 = vunpack.c.h.b16 %v35
    %v82 = vunpack.c.l.b16 %v36
    %v83 = vunpack.c.h.b16 %v36
    %v84 = vunpack.c.l.b16 %v37
    %v85 = vunpack.c.h.b16 %v37
    %v86 = vunpack.c.l.b16 %v38
    %v87 = vunpack.c.h.b16 %v38
    %v88 = vunpack.c.l.b16 %v39
    %v89 = vunpack.c.h.b16 %v39
    %v90 = vunpack.c.l.b16 %v40
    %v91 = vunpack.c.h.b16 %v40
    %v92 = vunpack.c.l.b16 %v41
    %v93 = vunpack.c.h.b16 %v41
    %v94 = vunpack.c.l.b16 %v42
    %v95 = vunpack.c.h.b16 %v42
    %v96 = vunpack.c.l.b16 %v43
    %v97 = vunpack.c.h.b16 %v43
    %v98 = vpack.c.b16 %v68, %v66
    %v99 = vpack.c.b16 %v69, %v67
    %v100 = vpack.c.b16 %v72, %v70
    %v101 = vpack.c.b16 %v73, %v71
    %v102 = vpack.c.b16 %v76, %v74
    %v103 = vpack.c.b16 %v77, %v75
    %v104 = vpack.c.b16 %v80, %v78
    %v105 = vpack.c.b16 %v81, %v79
    %v106 = vpack.c.b16 %v84, %v82
    %v107 = vpack.c.b16 %v85, %v83
    %v108 = vpack.c.b16 %v88, %v86
    %v109 = vpack.c.b16 %v89, %v87
    %v110 = vpack.c.b16 %v92, %v90
    %v111 = vpack.c.b16 %v93, %v91
    %v112 = vpack.c.b16 %v96, %v94
    %v113 = vpack.c.b16 %v97, %v95
    %130 = vmatprep.subr.bf16.mxu0 %v99
    %131 = vmatpush1.bf16.msra.mxu0 %v98
    %132 = vmatprep.subr.bf16.mxu0 %v101
    %133 = vmatpush1.bf16.msra.mxu0 %v100
    %134 = vmatprep.subr.bf16.mxu0 %v103
    %135 = vmatpush1.bf16.msra.mxu0 %v102
    %136 = vmatprep.subr.bf16.mxu0 %v105
    %137 = vmatpush1.bf16.msra.mxu0 %v104
    %138 = vmatprep.subr.bf16.mxu0 %v107
    %139 = vmatpush1.bf16.msra.mxu0 %v106
    %140 = vmatprep.subr.bf16.mxu0 %v109
    %141 = vmatpush1.bf16.msra.mxu0 %v108
    %142 = vmatprep.subr.bf16.mxu0 %v111
    %143 = vmatpush1.bf16.msra.mxu0 %v110
    %144 = vmatprep.subr.bf16.mxu0 %v113
    %145 = vmatpush1.bf16.msra.mxu0 %v112
    %146 = vmatprep.subr.bf16.mxu0 0
    %147 = vmatpush1.bf16.msra.mxu0 0
    %148 = vmatprep.subr.bf16.mxu0 0
    %149 = vmatpush1.bf16.msra.mxu0 0
    %150 = vmatprep.subr.bf16.mxu0 0
    %151 = vmatpush1.bf16.msra.mxu0 0
    %152 = vmatprep.subr.bf16.mxu0 0
    %153 = vmatpush1.bf16.msra.mxu0 0
    %154 = vmatprep.subr.bf16.mxu0 0
    %155 = vmatpush1.bf16.msra.mxu0 0
    %156 = vmatprep.subr.bf16.mxu0 0
    %157 = vmatpush1.bf16.msra.mxu0 0
    %158 = vmatprep.subr.bf16.mxu0 0
    %159 = vmatpush1.bf16.msra.mxu0 0
    %160 = vmatprep.subr.bf16.mxu0 0
    %161 = vmatpush1.bf16.msra.mxu0 0
    %162 = vmatprep.mubr.bf16.mxu0 0
    %163 = vmatmul.mubr.bf16.gmra.mrb[0].mxu0 %v48
    %v164 = vpop.f32.mrb[0].mxu0
    %v165 = vadd.f32 0.0, %v164
    %v166 = vpop.f32.mrb[0].mxu0
    %v167 = vadd.f32 0.0, %v166
    %v168 = vpop.f32.mrb[0].mxu0
    %v169 = vadd.f32 0.0, %v168
    %v170 = vpop.f32.mrb[0].mxu0
    %v171 = vadd.f32 0.0, %v170
    %172 = vdwg.mxu0
    %v173 = vxor.u32 %v165, 2147483648
    %v174 = vxor.u32 %v169, 2147483648
    %v175 = vmul.f32 %v173, 1.442695
    %v176 = vpow.pop %v175
    %v177 = vmul.f32 %v174, 1.442695
    %v178 = vpow.pop %v177
    %v179 = vadd.f32 %v176, 1.0
    %v180 = vadd.f32 %v178, 1.0
    %v181 = vrcp.pop %v179
    %v182 = vmul.f32 1.0, %v181
    %v183 = vrcp.pop %v180
    %v184 = vmul.f32 1.0, %v183
    %185 = vst [vmem:[%s2] sm:$0xff] %v182
    %186 = vst [vmem:[%s2 + $0x18] sm:$0xff] %v184
    %v187 = vxor.u32 %v167, 2147483648
    %v188 = vxor.u32 %v171, 2147483648
    %v189 = vmul.f32 %v187, 1.442695
    %v190 = vpow.pop %v189
    %v191 = vmul.f32 %v188, 1.442695
    %v192 = vpow.pop %v191
    %v193 = vadd.f32 %v190, 1.0
    %v194 = vadd.f32 %v192, 1.0
    %v195 = vrcp.pop %v193
    %v196 = vmul.f32 1.0, %v195
    %v197 = vrcp.pop %v194
    %v198 = vmul.f32 1.0, %v197
    %s199 = scalar_lea.vmem %s2, 8
    %200 = vst [vmem:[%s199] sm:$0xff] %v196
    %201 = vst [vmem:[%s199 + $0x18] sm:$0xff] %v198
    %s202 = scalar_lea.vmem %s2, 16
    %203 = vst [vmem:[%s202] sm:$0xff] 0.5
    %204 = vst [vmem:[%s202 + $0x18] sm:$0xff] 0.5
    // Predicated region
    $region14: #{conv_transpose1d_sigmoid.1} parent=1 // pred_check
      _
    $region15: #{conv_transpose1d_sigmoid.1} parent=1 // pred_check_branch
      %206 = sbr.rel (0) target = $region17
    $region16: #{conv_transpose1d_sigmoid.1} parent=1 // pred_region
      _
    $region17: #{conv_transpose1d_sigmoid.1} parent=1 // pred_fallthru
      _
    // Predicated region
    $region18: #{conv_transpose1d_sigmoid.1} parent=1 // pred_check
      _
    $region19: #{conv_transpose1d_sigmoid.1} parent=1 // pred_check_branch
      %208 = sbr.rel (0) target = $region21
    $region20: #{conv_transpose1d_sigmoid.1} parent=1 // pred_region
      _
    $region21: #{conv_transpose1d_sigmoid.1} parent=1 // pred_fallthru
      _
    %209 = vsyncpa [#allocation3], 1

</llo_original>
